<compile_context>
chip_gen: v5e
topology: v5e:2x2
jax: 0.10.0
libtpu: 0.0.40
codegen_flags: <defaults>
</compile_context>

<pallas_src>
import math
import functools

import jax
import jax.numpy as jnp
from jax import lax
from jax.experimental import pallas as pl
from jax.experimental.pallas import tpu as pltpu


def _round_up(v, m):
    return (v + m - 1) // m * m


def _pad2(a, rows, cols):
    pr, pc = rows - a.shape[0], cols - a.shape[1]
    if pr or pc:
        a = jnp.pad(a, ((0, pr), (0, pc)))
    return a


def _pick_tile(n, *, lane, candidates=(512, 256, 128)):
    """Pick a tile size for a dimension of extent n.

    Prefers the largest candidate unless a smaller candidate saves a
    meaningful amount of padding (>~6%).  Tiny row (sublane) dims collapse to
    a single 8-aligned tile; lane dims never go below 128.
    """
    align = 128 if lane else 8
    small = _round_up(max(n, 1), align)
    if small <= candidates[-1]:
        return candidates[-1] if lane else small
    best_pad = min(_round_up(n, c) for c in candidates)
    slack = n // 16
    for c in candidates:                       # descending: prefer bigger tiles
        if _round_up(n, c) <= best_pad + slack:
            return c
    return candidates[-1]


def _linear_kernel(x_ref, wt_ref, b_ref, o_ref, *, scale, mxu_dtype):
    # In-kernel activation cast (hidden under MXU work); (bm, K) @ (K, K) with
    # f32 accumulation; bias (+ optional folded 1/sqrt(n_hid)) stays on the
    # f32 VPU path; single cast at the store.
    x = x_ref[...].astype(mxu_dtype)
    acc = jnp.dot(x, wt_ref[...], preferred_element_type=jnp.float32)
    acc = acc + b_ref[...]
    if scale != 1.0:
        acc = acc * scale
    o_ref[...] = acc.astype(o_ref.dtype)


def _linear(xp, wt, b, row_tile, *, scale, mxu_dtype, out_dtype):
    m, k = xp.shape
    kernel = functools.partial(_linear_kernel, scale=scale, mxu_dtype=mxu_dtype)
    in_b = jnp.dtype(xp.dtype).itemsize
    w_b = jnp.dtype(wt.dtype).itemsize
    out_b = jnp.dtype(out_dtype).itemsize
    cost = pl.CostEstimate(
        flops=2 * m * k * k,
        transcendentals=0,
        bytes_accessed=in_b * m * k + w_b * k * k + 4 * k + out_b * m * k)
    # TODO(synk): for very large n_hid (k_pad > ~3072) add a K grid axis with a
    # f32 VMEM accumulator instead of keeping the full (K, K) weight resident.
    return pl.pallas_call(
        kernel,
        out_shape=jax.ShapeDtypeStruct((m, k), out_dtype),
        grid_spec=pltpu.PrefetchScalarGridSpec(
            num_scalar_prefetch=0,
            grid=(m // row_tile,),
            in_specs=[
                pl.BlockSpec((row_tile, k), lambda i: (i, 0)),   # x/y row tile
                # Constant-index blocks -> single-buffered (no wasted VMEM).
                pl.BlockSpec((k, k), lambda i: (0, 0),           # W^T [in,out]
                             pipeline_mode=pl.Buffered(1)),
                pl.BlockSpec((1, k), lambda i: (0, 0),           # bias row
                             pipeline_mode=pl.Buffered(1)),
            ],
            out_specs=pl.BlockSpec((row_tile, k), lambda i: (i, 0)),
        ),
        compiler_params=pltpu.CompilerParams(
            dimension_semantics=("parallel",)),
        cost_estimate=cost,
    )(xp, wt, b)


def _score_kernel(tx_ref, ty_ref, o_ref):
    # (bm, K) x (bn, K) contracted on K ("NT" matmul on the MXU): no
    # wrapper-side ty.T HBM pass; f32 accumulation; lane-dense stores.
    o_ref[...] = lax.dot_general(
        tx_ref[...], ty_ref[...],
        dimension_numbers=(((1,), (1,)), ((), ())),
        preferred_element_type=jnp.float32).astype(o_ref.dtype)


def _scores(tx, ty, bm, bn, *, out_dtype, resident_ty_bytes):
    m, k = tx.shape
    n, _ = ty.shape
    a_b = jnp.dtype(tx.dtype).itemsize
    out_b = jnp.dtype(out_dtype).itemsize
    gm, gn = m // bm, n // bn

    ty_bytes = n * k * a_b
    vmem_est = ty_bytes + 2 * bm * k * a_b + 2 * bm * n * out_b
    resident = (ty_bytes <= resident_ty_bytes) and (vmem_est <= 24 * 1024 * 1024)

    if resident:
        # ty is DMA'd exactly once and kept resident (Buffered(1)); 1-D grid
        # over tx row tiles -> ty HBM traffic is n*k instead of gm*n*k.
        grid = (gm,)
        in_specs = [
            pl.BlockSpec((bm, k), lambda i: (i, 0)),
            pl.BlockSpec((n, k), lambda i: (0, 0),
                         pipeline_mode=pl.Buffered(1)),
        ]
        out_specs = pl.BlockSpec((bm, n), lambda i: (i, 0))
        semantics = ("parallel",)
        bytes_accessed = a_b * (m * k + n * k) + out_b * m * n
    else:
        # 2-D grid.  The operand indexed by the inner axis is re-fetched once
        # per outer block: pick the axis order that minimizes that traffic,
        # then make sure the leading ("parallel") axis has >=2 blocks so both
        # v7x TensorCores get work.
        m_outer_traffic = m * k + gm * n * k
        n_outer_traffic = n * k + gn * m * k
        m_outer = m_outer_traffic <= n_outer_traffic
        if m_outer and gm == 1 and gn > 1:
            m_outer = False
        elif (not m_outer) and gn == 1 and gm > 1:
            m_outer = True
        if m_outer:
            grid = (gm, gn)
            tx_map = lambda i, j: (i, 0)
            ty_map = lambda i, j: (j, 0)
            o_map = lambda i, j: (i, j)
            traffic = m_outer_traffic
        else:
            grid = (gn, gm)
            tx_map = lambda j, i: (i, 0)
            ty_map = lambda j, i: (j, 0)
            o_map = lambda j, i: (i, j)
            traffic = n_outer_traffic
        in_specs = [
            pl.BlockSpec((bm, k), tx_map),
            pl.BlockSpec((bn, k), ty_map),
        ]
        out_specs = pl.BlockSpec((bm, bn), o_map)
        semantics = ("parallel", "parallel")
        bytes_accessed = a_b * traffic + out_b * m * n

    cost = pl.CostEstimate(flops=2 * m * n * k, transcendentals=0,
                           bytes_accessed=bytes_accessed)
    return pl.pallas_call(
        _score_kernel,
        out_shape=jax.ShapeDtypeStruct((m, n), out_dtype),
        grid_spec=pltpu.PrefetchScalarGridSpec(
            num_scalar_prefetch=0,
            grid=grid,
            in_specs=in_specs,
            out_specs=out_specs,
        ),
        compiler_params=pltpu.CompilerParams(dimension_semantics=semantics),
        cost_estimate=cost,
    )(tx, ty)


def matcher_forward(x, y, w_left, b_left, w_right, b_right,
                    *, mxu_dtype=jnp.bfloat16, score_dtype=jnp.float32,
                    resident_ty_bytes=8 * 1024 * 1024):
    """Matcher.forward(x, y) with infer=False, pair=False.

    mxu_dtype: MXU operand dtype (default bf16 -> ~3-4x MXU throughput and
      half the tx/ty HBM/VMEM traffic; accumulation is f32 either way).
      Pass jnp.float32 for bit-tight results, or None to use x.dtype.
    score_dtype: dtype of the returned score matrix (bf16 halves the score
      kernel's output traffic if downstream tolerates it).
    """
    n_x, n_hid = x.shape
    n_y, _ = y.shape
    inv_sqrt_hd = 1.0 / math.sqrt(n_hid)
    cdt = jnp.dtype(mxu_dtype) if mxu_dtype is not None else jnp.dtype(x.dtype)

    # Padded / tiled geometry: lane (last) dims are multiples of 128; row
    # tiles picked to minimize padding waste.
    k_pad = _round_up(n_hid, 128)
    bm = _pick_tile(n_x, lane=False)
    m_pad = _round_up(n_x, bm)
    bn = _pick_tile(n_y, lane=True)
    n_pad = _round_up(n_y, bn)

    # No activation dtype cast here (done in-kernel -> saves a full HBM pass);
    # only zero-pad to tile multiples.  Padded rows/cols are inert (contribute
    # exactly 0) and are sliced off at the end.
    xp = _pad2(x, m_pad, k_pad)
    yp = _pad2(y, n_pad, k_pad)
    # Pre-transpose weights once in the wrapper -> [in, out]; weights/bias are
    # small, so casting them wrapper-side is cheap.
    wlt = _pad2(w_left.T, k_pad, k_pad).astype(cdt)
    wrt = _pad2(w_right.T, k_pad, k_pad).astype(cdt)
    blp = _pad2(b_left.reshape(1, n_hid), 1, k_pad).astype(jnp.float32)
    brp = _pad2(b_right.reshape(1, n_hid), 1, k_pad).astype(jnp.float32)

    # tx carries the folded 1/sqrt(n_hid); ty is computed exactly once and
    # kept in [n, k] layout (no ty.T pass anywhere).
    tx = _linear(xp, wlt, blp, bm, scale=inv_sqrt_hd,
                 mxu_dtype=cdt, out_dtype=cdt)
    ty = _linear(yp, wrt, brp, bn, scale=1.0,
                 mxu_dtype=cdt, out_dtype=cdt)

    res = _scores(tx, ty, bm, bn, out_dtype=score_dtype,
                  resident_ty_bytes=resident_ty_bytes)
    return res[:n_x, :n_y]


def matcher_reference(x, y, w_left, b_left, w_right, b_right):
    tx = x @ w_left.T + b_left
    ty = y @ w_right.T + b_right
    return (tx @ ty.T) / math.sqrt(x.shape[-1])


if __name__ == "__main__":
    n_hid = 32
    n_x, n_y = 16, 8

    key = jax.random.PRNGKey(0)
    kx, ky, kwl, kbl, kwr, kbr = jax.random.split(key, 6)

    # Deterministic parameter init mimicking nn.Linear's U(-1/sqrt(fan_in), +)
    bound = 1.0 / math.sqrt(n_hid)
    w_left = jax.random.uniform(kwl, (n_hid, n_hid), jnp.float32, -bound, bound)
    b_left = jax.random.uniform(kbl, (n_hid,), jnp.float32, -bound, bound)
    w_right = jax.random.uniform(kwr, (n_hid, n_hid), jnp.float32, -bound, bound)
    b_right = jax.random.uniform(kbr, (n_hid,), jnp.float32, -bound, bound)

    x = jax.random.normal(kx, (n_x, n_hid), jnp.float32)
    y = jax.random.normal(ky, (n_y, n_hid), jnp.float32)

    ref = matcher_reference(x, y, w_left, b_left, w_right, b_right)

    # 1) Bit-tight f32 MXU path (resident-ty score kernel).
    out_f32 = jax.block_until_ready(
        matcher_forward(x, y, w_left, b_left, w_right, b_right,
                        mxu_dtype=jnp.float32))
    assert out_f32.shape == (n_x, n_y)
    assert jnp.allclose(out_f32, ref, atol=1e-4, rtol=1e-4), "f32 mismatch"

    # 2) Same f32 path forced onto the tiled (non-resident) score grid.
    out_tiled = jax.block_until_ready(
        matcher_forward(x, y, w_left, b_left, w_right, b_right,
                        mxu_dtype=jnp.float32, resident_ty_bytes=0))
    assert jnp.allclose(out_tiled, ref, atol=1e-4, rtol=1e-4), "tiled mismatch"

    # 3) Default bf16 MXU operands (f32 accumulation): looser tolerance.
    out_bf16 = jax.block_until_ready(
        matcher_forward(x, y, w_left, b_left, w_right, b_right))
    assert out_bf16.shape == (n_x, n_y)
    assert jnp.allclose(out_bf16, ref, atol=5e-2, rtol=5e-2), "bf16 mismatch"

    # TODO(synk): `infer=True` host-side caching of tx and the `pair=True`
    # elementwise-dot path are host control flow / trivial variants; only the
    # default matmul path is implemented as kernels.
    print("KERNEL_OK")
</pallas_src>

<mosaic_0001>
module attributes {stable_mosaic.version = 11 : i64} {
  func.func @_linear_kernel(%arg0: i32, %arg1: memref<16x128xf32, #tpu.memory_space<vmem>>, %arg2: memref<128x128xf32, #tpu.memory_space<vmem>>, %arg3: memref<1x128xf32, #tpu.memory_space<vmem>>, %arg4: memref<16x128xf32, #tpu.memory_space<vmem>>) attributes {dimension_semantics = [#tpu.dimension_semantics<parallel>], iteration_bounds = array<i64: 1>, scalar_prefetch = 0 : i64, scratch_operands = 0 : i64, tpu.core_type = #tpu.core_type<tc>, window_params = [{transform_indices = @transform_0, window_bounds = array<i64: 16, 128>}, {pipeline_mode = #tpu.pipeline_mode<synchronous>, transform_indices = @transform_1, window_bounds = array<i64: 128, 128>}, {pipeline_mode = #tpu.pipeline_mode<synchronous>, transform_indices = @transform_2, window_bounds = array<i64: 1, 128>}, {transform_indices = @transform_3, window_bounds = array<i64: 16, 128>}]} {
    %c0 = arith.constant 0 : index
    %c0_0 = arith.constant 0 : index
    %0 = vector.load %arg1[%c0, %c0_0] : memref<16x128xf32, #tpu.memory_space<vmem>>, vector<16x128xf32>
    %c0_1 = arith.constant 0 : index
    %c0_2 = arith.constant 0 : index
    %1 = vector.load %arg2[%c0_1, %c0_2] : memref<128x128xf32, #tpu.memory_space<vmem>>, vector<128x128xf32>
    %cst = arith.constant dense<0.000000e+00> : vector<16x128xf32>
    %2 = tpu.matmul %0, %1, %cst {dimension_numbers = #tpu.dot_dimension_numbers<[1], [0], [0], [1], [0, 0, 1, 1], [], []>} : vector<16x128xf32>, vector<128x128xf32>, vector<16x128xf32> -> vector<16x128xf32>
    %c0_3 = arith.constant 0 : index
    %c0_4 = arith.constant 0 : index
    %3 = vector.load %arg3[%c0_3, %c0_4] : memref<1x128xf32, #tpu.memory_space<vmem>>, vector<1x128xf32>
    %4 = vector.broadcast %3 : vector<1x128xf32> to vector<16x128xf32>
    %5 = arith.addf %2, %4 : vector<16x128xf32>
    %cst_5 = arith.constant 0.176776692 : f32
    %6 = vector.broadcast %cst_5 : f32 to vector<16x128xf32>
    %7 = arith.mulf %5, %6 : vector<16x128xf32>
    %c0_6 = arith.constant 0 : index
    %c0_7 = arith.constant 0 : index
    %8 = vector.load %arg4[%c0_6, %c0_7] : memref<16x128xf32, #tpu.memory_space<vmem>>, vector<16x128xf32>
    tpu.vector_store %arg4[%c0_6, %c0_7], %7 {strides = array<i32>} : memref<16x128xf32, #tpu.memory_space<vmem>>, vector<16x128xf32>,
    return
  }
  func.func @transform_0(%arg0: i32) -> (i32, i32) {
    %c0_i32 = arith.constant 0 : i32
    %c0_i32_0 = arith.constant 0 : i32
    return %arg0, %c0_i32 : i32, i32
  }
  func.func @transform_1(%arg0: i32) -> (i32, i32) {
    %c0_i32 = arith.constant 0 : i32
    %c0_i32_0 = arith.constant 0 : i32
    %c0_i32_1 = arith.constant 0 : i32
    return %c0_i32, %c0_i32_0 : i32, i32
  }
  func.func @transform_2(%arg0: i32) -> (i32, i32) {
    %c0_i32 = arith.constant 0 : i32
    %c0_i32_0 = arith.constant 0 : i32
    %c0_i32_1 = arith.constant 0 : i32
    return %c0_i32, %c0_i32_0 : i32, i32
  }
  func.func @transform_3(%arg0: i32) -> (i32, i32) {
    %c0_i32 = arith.constant 0 : i32
    %c0_i32_0 = arith.constant 0 : i32
    return %arg0, %c0_i32 : i32, i32
  }
}

</mosaic_0001>

<llo_original>
// kernel: tpu_custom_call.1
$region0: #{tpu_custom_call.1}
  #allocation0 [shape = 'u32[]', space=smem, size = 0x4, offset = 0x4, fixed_abs, tag = 'smem constant byte address 0x4 - core index']
  #allocation1 [shape = 'u32[72,128]{1,0:T(1,128)}', space=vmem, size = 0x9000, scoped, tag = 'internal scratch']
  %s0 = inlined_call_operand.hbm [shape: f32[16,128], index: 0, kind: input, shape index: {}]
  %s1 = inlined_call_operand.hbm [shape: f32[128,128], index: 1, kind: input, shape index: {}]
  %s2 = inlined_call_operand.vmem [shape: f32[1,128], index: 2, kind: input, shape index: {}]
  %s3 = inlined_call_operand.hbm [shape: f32[16,128], index: 3, kind: output, shape index: {}]
  %s4 = sld [smem:[#allocation0]]
  $region30: #{tpu_custom_call.1} parent=0
    _
  %s6 = ssub.s32 1, %s4
  %s7 = scalar_select 0, %s6, %s4
  $region1: #{tpu_custom_call.1} parent=0
    #allocation2 [shape = 'u8[8192]{0}', space=vmem, size = 0x2000, scoped, tag = 'input window, operand 0, single buffered']
    #allocation3 [shape = 's32[1]{0}', space=sflag, size = 0x4, scoped, tag = 'scoped memory for tpu_custom_call.1']
    #allocation4 [shape = 's32[1]{0}', space=sflag, size = 0x4, scoped, tag = 'scoped memory for tpu_custom_call.1']
    #allocation5 [shape = 'u8[65536]{0}', space=vmem, size = 0x10000, scoped, tag = 'input window, operand 1, single buffered']
    #allocation6 [shape = 's32[1]{0}', space=sflag, size = 0x4, scoped, tag = 'scoped memory for tpu_custom_call.1']
    #allocation7 [shape = 'u8[8192]{0}', space=vmem, size = 0x2000, scoped, tag = 'output window, operand 0, single buffered']
    %8 = vsyncpa [#allocation3], 0
    %9 = vsyncpa [#allocation6], 0
    %10 = vsyncpa [#allocation4], 0
    // Predicated region
    $region2: #{tpu_custom_call.1} parent=1 // pred_check
      _
    $region3: #{tpu_custom_call.1} parent=1 // pred_check_branch
      %12 = sbr.rel (0) target = $region5
    $region4: #{tpu_custom_call.1} parent=1 // pred_region
      %14 = vsyncadd [#allocation3], 0
      %s15 = sshll.u32 %s0, 4
      %s16 = int_to_ptr.hbm [resolvable:$true] %s15
      %s17 = sshll.u32 [#allocation2], 4
      %s18 = int_to_ptr.vmem [resolvable:$true] %s17
      %23 = dma.hbm_to_vmem [thread:$0]  %s16, 256, %s18, [#allocation3], 128, 128, 8
    $region5: #{tpu_custom_call.1} parent=1 // pred_fallthru
      _
    // Predicated region
    $region6: #{tpu_custom_call.1} parent=1 // pred_check
      _
    $region7: #{tpu_custom_call.1} parent=1 // pred_check_branch
      %25 = sbr.rel (0) target = $region9
    $region8: #{tpu_custom_call.1} parent=1 // pred_region
      %27 = vsyncadd [#allocation6], 0
      %s28 = sshll.u32 %s1, 4
      %s29 = int_to_ptr.hbm [resolvable:$true] %s28
      %s30 = sshll.u32 [#allocation5], 4
      %s31 = int_to_ptr.vmem [resolvable:$true] %s30
      %36 = dma.hbm_to_vmem [thread:$0]  %s29, 2048, %s31, [#allocation6], 128, 128, 8
    $region9: #{tpu_custom_call.1} parent=1 // pred_fallthru
      _
    // Predicated region
    $region10: #{tpu_custom_call.1} parent=1 // pred_check
      _
    $region11: #{tpu_custom_call.1} parent=1 // pred_check_branch
      %38 = sbr.rel (0) target = $region13
    $region12: #{tpu_custom_call.1} parent=1 // pred_region
      _
    $region13: #{tpu_custom_call.1} parent=1 // pred_fallthru
      _
    // Predicated region
    $region14: #{tpu_custom_call.1} parent=1 // pred_check
      _
    $region15: #{tpu_custom_call.1} parent=1 // pred_check_branch
      %40 = sbr.rel (0) target = $region17
    $region16: #{tpu_custom_call.1} parent=1 // pred_region
      %42 = dma.done [#allocation3], 256
    $region17: #{tpu_custom_call.1} parent=1 // pred_fallthru
      _
    // Predicated region
    $region18: #{tpu_custom_call.1} parent=1 // pred_check
      _
    $region19: #{tpu_custom_call.1} parent=1 // pred_check_branch
      %44 = sbr.rel (0) target = $region21
    $region20: #{tpu_custom_call.1} parent=1 // pred_region
      %46 = dma.done [#allocation6], 2048
    $region21: #{tpu_custom_call.1} parent=1 // pred_fallthru
      _
    %v47 = vld [vmem:[#allocation2] sm:$0xff]
    %v48 = vld [vmem:[#allocation2 + $0x8] sm:$0xff]
    %v49 = vld [vmem:[#allocation5] sm:$0xff]
    %v50 = vld [vmem:[#allocation5 + $0x8] sm:$0xff]
    %v51 = vld [vmem:[#allocation5 + $0x10] sm:$0xff]
    %v52 = vld [vmem:[#allocation5 + $0x18] sm:$0xff]
    %v53 = vld [vmem:[#allocation5 + $0x20] sm:$0xff]
    %v54 = vld [vmem:[#allocation5 + $0x28] sm:$0xff]
    %v55 = vld [vmem:[#allocation5 + $0x30] sm:$0xff]
    %v56 = vld [vmem:[#allocation5 + $0x38] sm:$0xff]
    %v57 = vld [vmem:[#allocation5 + $0x40] sm:$0xff]
    %v58 = vld [vmem:[#allocation5 + $0x48] sm:$0xff]
    %v59 = vld [vmem:[#allocation5 + $0x50] sm:$0xff]
    %v60 = vld [vmem:[#allocation5 + $0x58] sm:$0xff]
    %v61 = vld [vmem:[#allocation5 + $0x60] sm:$0xff]
    %v62 = vld [vmem:[#allocation5 + $0x68] sm:$0xff]
    %v63 = vld [vmem:[#allocation5 + $0x70] sm:$0xff]
    %v64 = vld [vmem:[#allocation5 + $0x78] sm:$0xff]
    %v65 = vld [vmem:[%s2] sm:$0x1]
    %v67 = vperm.slane %v65, 0
    %69 = vmatpush.msra.mxu0 %v64
    %70 = vmatpush.msra.mxu0 %v63
    %71 = vmatpush.msra.mxu0 %v62
    %72 = vmatpush.msra.mxu0 %v61
    %73 = vmatpush.msra.mxu0 %v60
    %74 = vmatpush.msra.mxu0 %v59
    %75 = vmatpush.msra.mxu0 %v58
    %76 = vmatpush.msra.mxu0 %v57
    %77 = vmatpush.msra.mxu0 %v56
    %78 = vmatpush.msra.mxu0 %v55
    %79 = vmatpush.msra.mxu0 %v54
    %80 = vmatpush.msra.mxu0 %v53
    %81 = vmatpush.msra.mxu0 %v52
    %82 = vmatpush.msra.mxu0 %v51
    %83 = vmatpush.msra.mxu0 %v50
    %84 = vmatpush.msra.mxu0 %v49
    %85 = vmatmul.f32.gmra.mxu0 %v47
    %v86 = vpop.f32.mrf.mxu0
    %v87 = vadd.f32 %v67, %v86
    %88 = vmatmul.f32.gmra.mxu0 %v48
    %v89 = vpop.f32.mrf.mxu0
    %v90 = vadd.f32 %v67, %v89
    %91 = vdwg.mxu0
    %v92 = vmul.f32 %v87, 0.17677669
    %v93 = vmul.f32 %v90, 0.17677669
    %94 = vst [vmem:[#allocation7] sm:$0xff] %v92
    %95 = vst [vmem:[#allocation7 + $0x8] sm:$0xff] %v93
    // Predicated region
    $region22: #{tpu_custom_call.1} parent=1 // pred_check
      _
    $region23: #{tpu_custom_call.1} parent=1 // pred_check_branch
      %97 = sbr.rel (0) target = $region25
    $region24: #{tpu_custom_call.1} parent=1 // pred_region
      %99 = vsyncadd [#allocation4], 0
      %s100 = sshll.u32 [#allocation7], 4
      %s101 = int_to_ptr.vmem [resolvable:$true] %s100
      %s102 = sshll.u32 %s3, 4
      %s103 = int_to_ptr.hbm [resolvable:$true] %s102
      %108 = dma.vmem_to_hbm [thread:$0]  %s101, 256, %s103, [#allocation4], 128, 128, 8
    $region25: #{tpu_custom_call.1} parent=1 // pred_fallthru
      _
    // Predicated region
    $region26: #{tpu_custom_call.1} parent=1 // pred_check
      _
    $region27: #{tpu_custom_call.1} parent=1 // pred_check_branch
      %110 = sbr.rel (0) target = $region29
    $region28: #{tpu_custom_call.1} parent=1 // pred_region
      %112 = dma.done [#allocation4], 256
    $region29: #{tpu_custom_call.1} parent=1 // pred_fallthru
      _
    %113 = vsyncpa [#allocation3], 1
    %114 = vsyncpa [#allocation6], 1
    %115 = vsyncpa [#allocation4], 1

</llo_original>
